<compile_context>
chip_gen: v7x
topology: tpu7x:2x2x1
jax: 0.10.0
libtpu: 0.0.40
codegen_flags: <defaults>
</compile_context>

<pallas_src>
import functools

import jax
import jax.numpy as jnp
from jax.experimental import pallas as pl
from jax.experimental.pallas import tpu as pltpu


def _ranknet_kernel(x1_ref, x2_ref, w_ref, out_ref):
    """sigmoid((x1 - x2) @ w_eff) for one batch tile (natural layout)."""
    # All biases of the linear chain cancel exactly in s1 - s2.
    d = x1_ref[...] - x2_ref[...]                       # (tile, feat)
    s = jnp.dot(d, w_ref[...],                          # w_ref: (feat, 1)
                preferred_element_type=jnp.float32)     # (tile, 1)
    out_ref[...] = jax.nn.sigmoid(s)


def _round_up(x, m):
    return (x + m - 1) // m * m


@functools.partial(jax.jit, static_argnames=("tile_b",))
def ranknet_forward(x1, x2, params, *, tile_b=4096):
    """RankNet forward: sigmoid(model(x1) - model(x2)).

    x1, x2 : (batch, num_features) float32, natural layout (no copies made).
    params : PyTorch-layout weights w{i}: (out, in), biases b{i}: (out, 1).
             Biases are unused here: they cancel exactly in s1 - s2.
    Returns (batch, 1) float32, matching the torch module's output.
    """
    batch, feat = x1.shape

    # --- Collapse the linear chain: w_eff = W4 @ W3 @ W2 @ W1  -> (1, feat). ---
    hi = jax.lax.Precision.HIGHEST
    w_eff = params["w4"]
    for name in ("w3", "w2", "w1"):
        w_eff = jnp.dot(w_eff, params[name], precision=hi)
    w_col = w_eff.T                                      # (feat, 1)

    # --- Batch tiling: natural layout, no padding; ragged tail masked by Pallas.
    if batch <= tile_b:
        tile = batch                                     # whole-array block (always legal)
        if batch >= 1024:
            # v7x megacore: split a big single tile so both TensorCores work.
            tile = _round_up(pl.cdiv(batch, 2), 8)
    else:
        tile = max(8, (tile_b // 8) * 8)                 # sublane-aligned tile
    num_tiles = pl.cdiv(batch, tile)

    x_spec = pl.BlockSpec((tile, feat), lambda i: (i, 0))
    # Constant index_map -> the tiny weight column stays resident in VMEM.
    w_spec = pl.BlockSpec((feat, 1), lambda i: (0, 0))

    out = pl.pallas_call(
        _ranknet_kernel,
        out_shape=jax.ShapeDtypeStruct((batch, 1), jnp.float32),
        grid=(num_tiles,),
        in_specs=[x_spec, x_spec, w_spec],
        out_specs=pl.BlockSpec((tile, 1), lambda i: (i, 0)),
        compiler_params=pltpu.CompilerParams(
            dimension_semantics=("parallel",)),
    )(x1, x2, w_col)
    return out


def init_params(key, num_features):
    """PyTorch-layout params: w{i} (out, in), b{i} (out, 1), nn.Linear init."""
    dims = [(num_features, 32), (32, 16), (16, 8), (8, 1)]
    params = {}
    for i, (din, dout) in enumerate(dims, start=1):
        key, kw, kb = jax.random.split(key, 3)
        bound = 1.0 / (din ** 0.5)
        params[f"w{i}"] = jax.random.uniform(
            kw, (dout, din), jnp.float32, minval=-bound, maxval=bound)
        params[f"b{i}"] = jax.random.uniform(
            kb, (dout, 1), jnp.float32, minval=-bound, maxval=bound)
    return params


def ranknet_reference(x1, x2, p):
    """Plain-JAX per-layer reference matching the PyTorch module exactly."""
    hi = jax.lax.Precision.HIGHEST

    def mlp(x):
        for i in range(1, 5):
            x = jnp.dot(x, p[f"w{i}"].T, precision=hi) + p[f"b{i}"][:, 0]
        return x

    return jax.nn.sigmoid(mlp(x1) - mlp(x2))


if __name__ == "__main__":
    key = jax.random.PRNGKey(0)
    num_features = 32

    # 1) Small batch: single full-array block.
    key, k1, k2, kp = jax.random.split(key, 4)
    params = init_params(kp, num_features)
    x1 = jax.random.normal(k1, (8, num_features), jnp.float32)
    x2 = jax.random.normal(k2, (8, num_features), jnp.float32)
    out = jax.block_until_ready(ranknet_forward(x1, x2, params))
    ref = ranknet_reference(x1, x2, params)
    assert out.shape == (8, 1)
    assert jnp.allclose(out, ref, atol=1e-5, rtol=1e-5), "small-batch mismatch"

    # 2) Ragged batch with an explicit small tile: 3 grid steps, masked tail.
    key, k3, k4 = jax.random.split(key, 3)
    y1 = jax.random.normal(k3, (300, num_features), jnp.float32)
    y2 = jax.random.normal(k4, (300, num_features), jnp.float32)
    out2 = jax.block_until_ready(ranknet_forward(y1, y2, params, tile_b=128))
    ref2 = ranknet_reference(y1, y2, params)
    assert out2.shape == (300, 1)
    assert jnp.allclose(out2, ref2, atol=1e-5, rtol=1e-5), "ragged-tile mismatch"

    # 3) Medium batch with default tile: exercises the >=2-tile (v7x) split path.
    key, k5, k6 = jax.random.split(key, 3)
    z1 = jax.random.normal(k5, (1030, num_features), jnp.float32)
    z2 = jax.random.normal(k6, (1030, num_features), jnp.float32)
    out3 = jax.block_until_ready(ranknet_forward(z1, z2, params))
    ref3 = ranknet_reference(z1, z2, params)
    assert out3.shape == (1030, 1)
    assert jnp.allclose(out3, ref3, atol=1e-5, rtol=1e-5), "split-tile mismatch"

    print("KERNEL_OK")
</pallas_src>

<mosaic_0001>
module attributes {stable_mosaic.version = 11 : i64} {
  func.func @_ranknet_kernel(%arg0: i32, %arg1: memref<8x32xf32, #tpu.memory_space<vmem>>, %arg2: memref<8x32xf32, #tpu.memory_space<vmem>>, %arg3: memref<32x1xf32, #tpu.memory_space<vmem>>, %arg4: memref<8x1xf32, #tpu.memory_space<vmem>>) attributes {dimension_semantics = [#tpu.dimension_semantics<parallel>], iteration_bounds = array<i64: 1>, scalar_prefetch = 0 : i64, scratch_operands = 0 : i64, tpu.core_type = #tpu.core_type<tc>, window_params = [{transform_indices = @transform_0, window_bounds = array<i64: 8, 32>}, {transform_indices = @transform_1, window_bounds = array<i64: 8, 32>}, {pipeline_mode = #tpu.pipeline_mode<synchronous>, transform_indices = @transform_2, window_bounds = array<i64: 32, 1>}, {transform_indices = @transform_3, window_bounds = array<i64: 8, 1>}]} {
    %c0 = arith.constant 0 : index
    %c0_0 = arith.constant 0 : index
    %0 = vector.load %arg1[%c0, %c0_0] : memref<8x32xf32, #tpu.memory_space<vmem>>, vector<8x32xf32>
    %c0_1 = arith.constant 0 : index
    %c0_2 = arith.constant 0 : index
    %1 = vector.load %arg2[%c0_1, %c0_2] : memref<8x32xf32, #tpu.memory_space<vmem>>, vector<8x32xf32>
    %2 = arith.subf %0, %1 : vector<8x32xf32>
    %c0_3 = arith.constant 0 : index
    %c0_4 = arith.constant 0 : index
    %3 = vector.load %arg3[%c0_3, %c0_4] : memref<32x1xf32, #tpu.memory_space<vmem>>, vector<32x1xf32>
    %cst = arith.constant dense<0.000000e+00> : vector<8x1xf32>
    %4 = tpu.matmul %2, %3, %cst {dimension_numbers = #tpu.dot_dimension_numbers<[1], [0], [0], [1], [0, 0, 1, 1], [], []>} : vector<8x32xf32>, vector<32x1xf32>, vector<8x1xf32> -> vector<8x1xf32>
    %5 = arith.negf %4 : vector<8x1xf32>
    %6 = math.exp %5 : vector<8x1xf32>
    %cst_5 = arith.constant 1.000000e+00 : f32
    %7 = vector.broadcast %cst_5 : f32 to vector<8x1xf32>
    %8 = arith.addf %7, %6 : vector<8x1xf32>
    %9 = arith.divf %7, %8 : vector<8x1xf32>
    %c0_6 = arith.constant 0 : index
    %c0_7 = arith.constant 0 : index
    %10 = vector.load %arg4[%c0_6, %c0_7] : memref<8x1xf32, #tpu.memory_space<vmem>>, vector<8x1xf32>
    tpu.vector_store %arg4[%c0_6, %c0_7], %9 {strides = array<i32>} : memref<8x1xf32, #tpu.memory_space<vmem>>, vector<8x1xf32>,
    return
  }
  func.func @transform_0(%arg0: i32) -> (i32, i32) {
    %c0_i32 = arith.constant 0 : i32
    %c0_i32_0 = arith.constant 0 : i32
    return %arg0, %c0_i32 : i32, i32
  }
  func.func @transform_1(%arg0: i32) -> (i32, i32) {
    %c0_i32 = arith.constant 0 : i32
    %c0_i32_0 = arith.constant 0 : i32
    return %arg0, %c0_i32 : i32, i32
  }
  func.func @transform_2(%arg0: i32) -> (i32, i32) {
    %c0_i32 = arith.constant 0 : i32
    %c0_i32_0 = arith.constant 0 : i32
    %c0_i32_1 = arith.constant 0 : i32
    return %c0_i32, %c0_i32_0 : i32, i32
  }
  func.func @transform_3(%arg0: i32) -> (i32, i32) {
    %c0_i32 = arith.constant 0 : i32
    %c0_i32_0 = arith.constant 0 : i32
    return %arg0, %c0_i32 : i32, i32
  }
}

</mosaic_0001>

<llo_original>
// kernel: ranknet_forward.1
$region0: #{ranknet_forward.1}
  #allocation0 [shape = 'u32[]', space=smem, size = 0x4, offset = 0x4, fixed_abs, tag = 'smem constant byte address 0x4 - core index']
  #allocation1 [shape = 'u32[144,128]{1,0:T(1,128)}', space=vmem, size = 0x12000, scoped, tag = 'internal scratch']
  %s0 = inlined_call_operand.vmem [shape: f32[8,32], index: 0, kind: input, shape index: {}]
  %s1 = inlined_call_operand.vmem [shape: f32[8,32], index: 1, kind: input, shape index: {}]
  %s2 = inlined_call_operand.vmem [shape: f32[32,1], index: 2, kind: input, shape index: {}]
  %s3 = inlined_call_operand.vmem [shape: f32[8,1], index: 3, kind: output, shape index: {}]
  %s4 = sld [smem:[#allocation0]]
  $region22: #{ranknet_forward.1} parent=0
    _
  %s6 = ssub.s32 1, %s4
  %s7 = scalar_select 0, %s6, %s4
  // Predicated region
  $region2: #{ranknet_forward.1} parent=0 // pred_check
    _
  $region3: #{ranknet_forward.1} parent=0 // pred_check_branch
    %9 = sbr.rel (0) target = $region5
  $region4: #{ranknet_forward.1} parent=0 // pred_region
    _
  $region5: #{ranknet_forward.1} parent=0 // pred_fallthru
    _
  // Predicated region
  $region6: #{ranknet_forward.1} parent=0 // pred_check
    _
  $region7: #{ranknet_forward.1} parent=0 // pred_check_branch
    %11 = sbr.rel (0) target = $region9
  $region8: #{ranknet_forward.1} parent=0 // pred_region
    _
  $region9: #{ranknet_forward.1} parent=0 // pred_fallthru
    _
  // Predicated region
  $region10: #{ranknet_forward.1} parent=0 // pred_check
    _
  $region11: #{ranknet_forward.1} parent=0 // pred_check_branch
    %13 = sbr.rel (0) target = $region13
  $region12: #{ranknet_forward.1} parent=0 // pred_region
    _
  $region13: #{ranknet_forward.1} parent=0 // pred_fallthru
    _
  %v14 = vld [vmem:[%s0] sm:$0xff]
  %v15 = vld [vmem:[%s1] sm:$0xff]
  %v16 = vsub.f32 %v14, %v15
  %v17 = vld [vmem:[%s2] sm:$0xff]
  %v18 = vld [vmem:[%s2 + $0x8] sm:$0xff]
  %v19 = vld [vmem:[%s2 + $0x10] sm:$0xff]
  %v20 = vld [vmem:[%s2 + $0x18] sm:$0xff]
  %vm21 = vcmask 261120
  %v23 = vsel %vm21, %v16, 0
  %25 = vmatprep.subr.mxu0 0.0
  %26 = vmatpush1.msra.mxu0 %v17
  %27 = vmatprep.subr.mxu0 0.0
  %28 = vmatpush1.msra.mxu0 %v18
  %29 = vmatprep.subr.mxu0 0.0
  %30 = vmatpush1.msra.mxu0 %v19
  %31 = vmatprep.subr.mxu0 0.0
  %32 = vmatpush1.msra.mxu0 %v20
  %33 = vmatprep.subr.mxu0 0.0
  %34 = vmatpush1.msra.mxu0 0.0
  %35 = vmatprep.subr.mxu0 0.0
  %36 = vmatpush1.msra.mxu0 0.0
  %37 = vmatprep.subr.mxu0 0.0
  %38 = vmatpush1.msra.mxu0 0.0
  %39 = vmatprep.subr.mxu0 0.0
  %40 = vmatpush1.msra.mxu0 0.0
  %41 = vmatprep.subr.mxu0 0.0
  %42 = vmatpush1.msra.mxu0 0.0
  %43 = vmatprep.subr.mxu0 0.0
  %44 = vmatpush1.msra.mxu0 0.0
  %45 = vmatprep.subr.mxu0 0.0
  %46 = vmatpush1.msra.mxu0 0.0
  %47 = vmatprep.subr.mxu0 0.0
  %48 = vmatpush1.msra.mxu0 0.0
  %49 = vmatprep.subr.mxu0 0.0
  %50 = vmatpush1.msra.mxu0 0.0
  %51 = vmatprep.subr.mxu0 0.0
  %52 = vmatpush1.msra.mxu0 0.0
  %53 = vmatprep.subr.mxu0 0.0
  %54 = vmatpush1.msra.mxu0 0.0
  %55 = vmatprep.subr.mxu0 0.0
  %56 = vmatpush1.msra.mxu0 0.0
  %57 = vmatprep.subr.mxu0 0.0
  %58 = vmatpush1.msra.mxu0 0.0
  %59 = vmatprep.subr.mxu0 0.0
  %60 = vmatpush1.msra.mxu0 0.0
  %61 = vmatprep.subr.mxu0 0.0
  %62 = vmatpush1.msra.mxu0 0.0
  %63 = vmatprep.subr.mxu0 0.0
  %64 = vmatpush1.msra.mxu0 0.0
  %65 = vmatprep.subr.mxu0 0.0
  %66 = vmatpush1.msra.mxu0 0.0
  %67 = vmatprep.subr.mxu0 0.0
  %68 = vmatpush1.msra.mxu0 0.0
  %69 = vmatprep.subr.mxu0 0.0
  %70 = vmatpush1.msra.mxu0 0.0
  %71 = vmatprep.subr.mxu0 0.0
  %72 = vmatpush1.msra.mxu0 0.0
  %73 = vmatprep.subr.mxu0 0.0
  %74 = vmatpush1.msra.mxu0 0.0
  %75 = vmatprep.subr.mxu0 0.0
  %76 = vmatpush1.msra.mxu0 0.0
  %77 = vmatprep.subr.mxu0 0.0
  %78 = vmatpush1.msra.mxu0 0.0
  %79 = vmatprep.subr.mxu0 0.0
  %80 = vmatpush1.msra.mxu0 0.0
  %81 = vmatprep.subr.mxu0 0.0
  %82 = vmatpush1.msra.mxu0 0.0
  %83 = vmatprep.subr.mxu0 0.0
  %84 = vmatpush1.msra.mxu0 0.0
  %85 = vmatprep.subr.mxu0 0.0
  %86 = vmatpush1.msra.mxu0 0.0
  %87 = vmatprep.subr.mxu0 0.0
  %88 = vmatpush1.msra.mxu0 0.0
  %89 = vmatprep.mubr.f32.mxu0 0.0
  %90 = vmatmul.mubr.f32.gmra.mrb[0].mxu0 %v23
  %v91 = vpop.f32.mrb[0].mxu0
  %v92 = vadd.f32 0.0, %v91
  %v93 = vpop.f32.mrb[0].mxu0
  %94 = vdwg.mxu0
  %v95 = vxor.u32 %v92, 2147483648
  %v96 = vmul.f32 %v95, 1.442695
  %v97 = vpow.pop %v96
  %v98 = vadd.f32 %v97, 1.0
  %v99 = vrcp.pop %v98
  %v100 = vmul.f32 1.0, %v99
  %vm101 = vcmask 7168
  %102 = vst.msk [vmem:[%s3] sm:$0xff] %vm101, %v100
  // Predicated region
  $region14: #{ranknet_forward.1} parent=0 // pred_check
    _
  $region15: #{ranknet_forward.1} parent=0 // pred_check_branch
    %104 = sbr.rel (0) target = $region17
  $region16: #{ranknet_forward.1} parent=0 // pred_region
    _
  $region17: #{ranknet_forward.1} parent=0 // pred_fallthru
    _
  // Predicated region
  $region18: #{ranknet_forward.1} parent=0 // pred_check
    _
  $region19: #{ranknet_forward.1} parent=0 // pred_check_branch
    %106 = sbr.rel (0) target = $region21
  $region20: #{ranknet_forward.1} parent=0 // pred_region
    _
  $region21: #{ranknet_forward.1} parent=0 // pred_fallthru
    _

</llo_original>
